<compile_context>
chip_gen: v6e
topology: v6e:2x2x1
jax: 0.10.0
libtpu: 0.0.40
codegen_flags: <defaults>
</compile_context>

<pallas_src>
import functools

import numpy as np
import jax
import jax.numpy as jnp
from jax import lax
from jax.experimental import pallas as pl
from jax.experimental.pallas import tpu as pltpu

_BN_EPS = 1e-5


def _round_up(x, m):
    return (x + m - 1) // m * m


@functools.lru_cache(maxsize=None)
def _tile_params():
    """(vmem_limit_bytes, tm) picked per TPU generation; safe fallback otherwise."""
    vmem_limit = 32 * 1024 * 1024   # safe everywhere (v7x has 64 MiB physical VMEM)
    tm = 512
    try:
        info = pltpu.get_tpu_info()
        cap = getattr(info, "vmem_capacity_bytes", None)
        if cap is not None and cap >= 100 * 1024 * 1024:   # v5e / v6e: 128 MiB VMEM
            vmem_limit = 64 * 1024 * 1024
            tm = 1024
    except Exception:
        pass
    return vmem_limit, tm


# ---------------------------------------------------------------------------
# Pallas pass 1: tiled 1x1-conv matmul + per-tile partial channel stats
# ---------------------------------------------------------------------------
def _conv_stats_kernel(x_ref, w_ref, y_ref, sum_ref, ssq_ref):
    # bf16 x bf16 -> f32 accumulation on the MXU.
    y = jnp.dot(x_ref[...], w_ref[...], preferred_element_type=jnp.float32)
    # Stats from the f32 result; then downcast the streamed output to bf16.
    sum_ref[...] = jnp.sum(y, axis=0)[None, None]          # (1, 1, C) partial sum
    ssq_ref[...] = jnp.sum(y * y, axis=0)[None, None]      # (1, 1, C) partial sumsq
    y_ref[...] = y.astype(y_ref.dtype)


# ---------------------------------------------------------------------------
# Pallas pass 2: streaming normalize+affine with precomputed scale/shift
# ---------------------------------------------------------------------------
def _bn_apply_kernel(y_ref, scale_ref, shift_ref, o_ref):
    o_ref[...] = y_ref[...].astype(jnp.float32) * scale_ref[...] + shift_ref[...]


def _conv1x1_bn_train_pallas(feat2d, w_mat, gamma, beta):
    """Fused 1x1 conv (bias dropped, see header) + BatchNorm2d(train) over rows.

    feat2d: (M, K) bf16 concatenated SPP features, one row per output pixel.
    w_mat : (K, out_ch) f32 conv weight.  Returns (M, out_ch) f32.
    """
    M, K = feat2d.shape
    out_ch = w_mat.shape[1]
    vmem_limit, tm = _tile_params()

    c_pad = _round_up(out_ch, 128)          # lane-dense output stores
    tm = min(tm, _round_up(M, 16))          # bf16-friendly row tile
    m_pad = _round_up(M, tm)
    n_tiles = m_pad // tm

    # Zero padding: padded rows/cols contribute 0 to sum and sum-of-squares, and we
    # divide by the true M below, so batch statistics stay exact.
    feat_p = feat2d if m_pad == M else jnp.pad(feat2d, ((0, m_pad - M), (0, 0)))
    w_p = jnp.pad(w_mat.astype(jnp.bfloat16), ((0, 0), (0, c_pad - out_ch)))

    # Pass 1: conv matmul + per-tile partial stats.  Every grid step writes its own
    # stats row, so the M axis is fully "parallel" (megacore on v7x).
    y, part_sum, part_ssq = pl.pallas_call(
        _conv_stats_kernel,
        out_shape=(
            jax.ShapeDtypeStruct((m_pad, c_pad), jnp.bfloat16),
            jax.ShapeDtypeStruct((n_tiles, 1, c_pad), jnp.float32),
            jax.ShapeDtypeStruct((n_tiles, 1, c_pad), jnp.float32),
        ),
        grid=(n_tiles,),
        in_specs=[
            pl.BlockSpec((tm, K), lambda i: (i, 0)),
            pl.BlockSpec((K, c_pad), lambda i: (0, 0)),
        ],
        out_specs=(
            pl.BlockSpec((tm, c_pad), lambda i: (i, 0)),
            pl.BlockSpec((1, 1, c_pad), lambda i: (i, 0, 0)),
            pl.BlockSpec((1, 1, c_pad), lambda i: (i, 0, 0)),
        ),
        compiler_params=pltpu.CompilerParams(
            dimension_semantics=("parallel",),
            vmem_limit_bytes=vmem_limit),
    )(feat_p, w_p)

    # Tiny (n_tiles, C) reduction + per-channel scale/shift: plain XLA.
    inv_m = 1.0 / float(M)
    ch_sum = jnp.sum(part_sum[:, 0, :], axis=0)
    ch_ssq = jnp.sum(part_ssq[:, 0, :], axis=0)
    mean = ch_sum * inv_m
    var = jnp.maximum(ch_ssq * inv_m - mean * mean, 0.0)        # biased variance
    g_p = jnp.pad(gamma.astype(jnp.float32), (0, c_pad - out_ch))
    b_p = jnp.pad(beta.astype(jnp.float32), (0, c_pad - out_ch))
    scale = (g_p * lax.rsqrt(var + _BN_EPS)).reshape(1, c_pad)
    shift = (b_p - mean * scale[0]).reshape(1, c_pad)

    # Pass 2: streaming normalize+affine (pure map -> "parallel").
    out = pl.pallas_call(
        _bn_apply_kernel,
        out_shape=jax.ShapeDtypeStruct((m_pad, c_pad), jnp.float32),
        grid=(n_tiles,),
        in_specs=[
            pl.BlockSpec((tm, c_pad), lambda i: (i, 0)),
            pl.BlockSpec((1, c_pad), lambda i: (0, 0)),
            pl.BlockSpec((1, c_pad), lambda i: (0, 0)),
        ],
        out_specs=pl.BlockSpec((tm, c_pad), lambda i: (i, 0)),
        compiler_params=pltpu.CompilerParams(
            dimension_semantics=("parallel",),
            vmem_limit_bytes=vmem_limit),
    )(y, scale, shift)

    return out[:M, :out_ch]


# ---------------------------------------------------------------------------
# Glue: multi-scale max-pool pyramid + bilinear upsample + concat (NHWC, plain JAX)
# ---------------------------------------------------------------------------
def _maxpool2_nhwc(x):
    n, h, w, c = x.shape
    return jnp.max(x.reshape(n, h // 2, 2, w // 2, 2, c), axis=(2, 4))


def _bilinear_matrix(in_size, out_size):
    """Interp matrix matching nn.Upsample(mode='bilinear', align_corners=False)."""
    scale = in_size / out_size
    dst = np.arange(out_size)
    src = np.maximum((dst + 0.5) * scale - 0.5, 0.0)
    i0 = np.minimum(np.floor(src).astype(np.int64), in_size - 1)
    i1 = np.minimum(i0 + 1, in_size - 1)
    w1 = src - i0
    w0 = 1.0 - w1
    u = np.zeros((out_size, in_size), np.float32)
    np.add.at(u, (dst, i0), w0)
    np.add.at(u, (dst, i1), w1)
    return jnp.asarray(u)


def _bilinear_upsample_nhwc(x, h_out, w_out, *, precision=None):
    _, h_in, w_in, _ = x.shape
    u_h = _bilinear_matrix(h_in, h_out).astype(x.dtype)
    u_w = _bilinear_matrix(w_in, w_out).astype(x.dtype)
    # Interp weights (multiples of 1/16) are exact in bf16; default precision avoids
    # the multi-pass f32 MXU emulation HIGHEST would force on v5e/v6e.
    return jnp.einsum('ih,nhwc,jw->nijc', u_h, x, u_w, precision=precision)


def _build_spp_features(x_nchw, *, dtype=jnp.bfloat16, precision=None):
    n, cin, h, w = x_nchw.shape
    assert h % 16 == 0 and w % 16 == 0, "SPP block needs H, W divisible by 16"
    x = jnp.transpose(x_nchw, (0, 2, 3, 1)).astype(dtype)   # NCHW -> NHWC
    p2 = _maxpool2_nhwc(x)                                   # (n, h/2,  w/2,  cin)
    p4 = _maxpool2_nhwc(p2)                                  # (n, h/4,  w/4,  cin)
    p8 = _maxpool2_nhwc(p4)                                  # (n, h/8,  w/8,  cin)
    p16 = _maxpool2_nhwc(p8)                                 # (n, h/16, w/16, cin)
    ho, wo = h // 2, w // 2
    feat = jnp.concatenate(
        [p2,
         _bilinear_upsample_nhwc(p4, ho, wo, precision=precision),
         _bilinear_upsample_nhwc(p8, ho, wo, precision=precision),
         _bilinear_upsample_nhwc(p16, ho, wo, precision=precision)], axis=-1)
    return feat                                              # (n, h/2, w/2, 4*cin)


def spatial_pyramid_pooling_forward(x_nchw, params):
    """Equivalent of SpatialPyramidPoolingBlock.forward (BatchNorm in training mode).

    Input/output are NCHW; output is (N, out_ch, H/2, W/2)."""
    feat = _build_spp_features(x_nchw)                       # bf16 NHWC features
    n, ho, wo, k = feat.shape
    out_ch = params["w"].shape[0]
    w_mat = params["w"].reshape(out_ch, k).T                 # (K, out_ch)
    # NOTE: the conv bias params["b"] is intentionally dropped -- training-mode
    # BatchNorm subtracts the batch mean immediately after the 1x1 conv, which
    # cancels any per-channel bias exactly.
    out2d = _conv1x1_bn_train_pallas(feat.reshape(n * ho * wo, k), w_mat,
                                     params["g"], params["beta"])
    out = out2d.reshape(n, ho, wo, out_ch)
    # TODO(synk): consumers that accept NHWC (or bf16) could skip this final
    # bandwidth-bound transpose; kept here to match the PyTorch NCHW contract.
    return jnp.transpose(out, (0, 3, 1, 2))                  # NHWC -> NCHW


# ---------------------------------------------------------------------------
# Pure-JAX f32 reference (for the in-script correctness check only)
# ---------------------------------------------------------------------------
def _reference(x_nchw, params):
    feat = _build_spp_features(x_nchw, dtype=jnp.float32,
                               precision=lax.Precision.HIGHEST)
    out_ch = params["w"].shape[0]
    wm = params["w"].reshape(out_ch, -1)
    y = jnp.einsum('nhwk,ok->nhwo', feat, wm, precision=lax.Precision.HIGHEST)
    y = y + params["b"]                                      # bias kept here
    mean = jnp.mean(y, axis=(0, 1, 2), keepdims=True)
    var = jnp.mean((y - mean) ** 2, axis=(0, 1, 2), keepdims=True)
    out = (y - mean) * lax.rsqrt(var + _BN_EPS) * params["g"] + params["beta"]
    return jnp.transpose(out, (0, 3, 1, 2))


# ---------------------------------------------------------------------------
if __name__ == "__main__":
    in_ch, out_ch = 4, 8
    N, H, W = 2, 16, 16

    key = jax.random.PRNGKey(0)
    kx, kw, kb = jax.random.split(key, 3)

    x = jax.random.normal(kx, (N, in_ch, H, W), dtype=jnp.float32)
    params = {
        # Conv2d(in_ch * 4, out_ch, 1)
        "w": jax.random.normal(kw, (out_ch, 4 * in_ch, 1, 1), dtype=jnp.float32) * 0.1,
        "b": jax.random.normal(kb, (out_ch,), dtype=jnp.float32) * 0.1,
        # BatchNorm2d(out_ch) -- PyTorch default init: weight=1, bias=0
        "g": jnp.ones((out_ch,), jnp.float32),
        "beta": jnp.zeros((out_ch,), jnp.float32),
    }

    fwd = jax.jit(spatial_pyramid_pooling_forward)
    out = jax.block_until_ready(fwd(x, params))

    ref = _reference(x, params)
    assert out.shape == (N, out_ch, H // 2, W // 2)
    # Tolerance accounts for the bf16 feature/MXU path (f32 accumulation, f32 BN).
    assert jnp.allclose(out, ref, atol=5e-2, rtol=5e-2), "mismatch vs reference"

    print("KERNEL_OK")
</pallas_src>

<mosaic_0001>
module attributes {stable_mosaic.version = 11 : i64} {
  func.func @_conv_stats_kernel(%arg0: i32, %arg1: memref<128x16xbf16, #tpu.memory_space<vmem>>, %arg2: memref<16x128xbf16, #tpu.memory_space<vmem>>, %arg3: memref<128x128xbf16, #tpu.memory_space<vmem>>, %arg4: memref<1x1x128xf32, #tpu.memory_space<vmem>>, %arg5: memref<1x1x128xf32, #tpu.memory_space<vmem>>) attributes {dimension_semantics = [#tpu.dimension_semantics<parallel>], iteration_bounds = array<i64: 1>, scalar_prefetch = 0 : i64, scratch_operands = 0 : i64, tpu.core_type = #tpu.core_type<tc>, window_params = [{transform_indices = @transform_0, window_bounds = array<i64: 128, 16>}, {pipeline_mode = #tpu.pipeline_mode<synchronous>, transform_indices = @transform_1, window_bounds = array<i64: 16, 128>}, {transform_indices = @transform_2, window_bounds = array<i64: 128, 128>}, {transform_indices = @transform_3, window_bounds = array<i64: 1, 1, 128>}, {transform_indices = @transform_4, window_bounds = array<i64: 1, 1, 128>}]} {
    %c0 = arith.constant 0 : index
    %c0_0 = arith.constant 0 : index
    %0 = vector.load %arg1[%c0, %c0_0] : memref<128x16xbf16, #tpu.memory_space<vmem>>, vector<128x16xbf16>
    %c0_1 = arith.constant 0 : index
    %c0_2 = arith.constant 0 : index
    %1 = vector.load %arg2[%c0_1, %c0_2] : memref<16x128xbf16, #tpu.memory_space<vmem>>, vector<16x128xbf16>
    %cst = arith.constant dense<0.000000e+00> : vector<128x128xf32>
    %2 = tpu.matmul %0, %1, %cst {dimension_numbers = #tpu.dot_dimension_numbers<[1], [0], [0], [1], [0, 0, 1, 1], [], []>} : vector<128x16xbf16>, vector<16x128xbf16>, vector<128x128xf32> -> vector<128x128xf32>
    %cst_3 = arith.constant dense<0.000000e+00> : vector<128xf32>
    %3 = vector.multi_reduction <add>, %2, %cst_3 [0] : vector<128x128xf32> to vector<128xf32>
    %4 = vector.shape_cast %3 : vector<128xf32> to vector<1x1x128xf32>
    %c0_4 = arith.constant 0 : index
    %c0_5 = arith.constant 0 : index
    %c0_6 = arith.constant 0 : index
    %5 = vector.load %arg4[%c0_4, %c0_5, %c0_6] : memref<1x1x128xf32, #tpu.memory_space<vmem>>, vector<1x1x128xf32>
    tpu.vector_store %arg4[%c0_4, %c0_5, %c0_6], %4 {strides = array<i32>} : memref<1x1x128xf32, #tpu.memory_space<vmem>>, vector<1x1x128xf32>,
    %6 = arith.mulf %2, %2 : vector<128x128xf32>
    %cst_7 = arith.constant dense<0.000000e+00> : vector<128xf32>
    %7 = vector.multi_reduction <add>, %6, %cst_7 [0] : vector<128x128xf32> to vector<128xf32>
    %8 = vector.shape_cast %7 : vector<128xf32> to vector<1x1x128xf32>
    %c0_8 = arith.constant 0 : index
    %c0_9 = arith.constant 0 : index
    %c0_10 = arith.constant 0 : index
    %9 = vector.load %arg5[%c0_8, %c0_9, %c0_10] : memref<1x1x128xf32, #tpu.memory_space<vmem>>, vector<1x1x128xf32>
    tpu.vector_store %arg5[%c0_8, %c0_9, %c0_10], %8 {strides = array<i32>} : memref<1x1x128xf32, #tpu.memory_space<vmem>>, vector<1x1x128xf32>,
    %10 = arith.truncf %2 : vector<128x128xf32> to vector<128x128xbf16>
    %c0_11 = arith.constant 0 : index
    %c0_12 = arith.constant 0 : index
    %11 = vector.load %arg3[%c0_11, %c0_12] : memref<128x128xbf16, #tpu.memory_space<vmem>>, vector<128x128xbf16>
    tpu.vector_store %arg3[%c0_11, %c0_12], %10 {strides = array<i32>} : memref<128x128xbf16, #tpu.memory_space<vmem>>, vector<128x128xbf16>,
    return
  }
  func.func @transform_0(%arg0: i32) -> (i32, i32) {
    %c0_i32 = arith.constant 0 : i32
    %c0_i32_0 = arith.constant 0 : i32
    return %arg0, %c0_i32 : i32, i32
  }
  func.func @transform_1(%arg0: i32) -> (i32, i32) {
    %c0_i32 = arith.constant 0 : i32
    %c0_i32_0 = arith.constant 0 : i32
    %c0_i32_1 = arith.constant 0 : i32
    return %c0_i32, %c0_i32_0 : i32, i32
  }
  func.func @transform_2(%arg0: i32) -> (i32, i32) {
    %c0_i32 = arith.constant 0 : i32
    %c0_i32_0 = arith.constant 0 : i32
    return %arg0, %c0_i32 : i32, i32
  }
  func.func @transform_3(%arg0: i32) -> (i32, i32, i32) {
    %c0_i32 = arith.constant 0 : i32
    %c0_i32_0 = arith.constant 0 : i32
    %c0_i32_1 = arith.constant 0 : i32
    return %arg0, %c0_i32, %c0_i32_0 : i32, i32, i32
  }
  func.func @transform_4(%arg0: i32) -> (i32, i32, i32) {
    %c0_i32 = arith.constant 0 : i32
    %c0_i32_0 = arith.constant 0 : i32
    %c0_i32_1 = arith.constant 0 : i32
    return %arg0, %c0_i32, %c0_i32_0 : i32, i32, i32
  }
}

module attributes {stable_mosaic.version = 11 : i64} {
  func.func @_bn_apply_kernel(%arg0: i32, %arg1: memref<128x128xbf16, #tpu.memory_space<vmem>>, %arg2: memref<1x128xf32, #tpu.memory_space<vmem>>, %arg3: memref<1x128xf32, #tpu.memory_space<vmem>>, %arg4: memref<128x128xf32, #tpu.memory_space<vmem>>) attributes {dimension_semantics = [#tpu.dimension_semantics<parallel>], iteration_bounds = array<i64: 1>, scalar_prefetch = 0 : i64, scratch_operands = 0 : i64, tpu.core_type = #tpu.core_type<tc>, window_params = [{transform_indices = @transform_0, window_bounds = array<i64: 128, 128>}, {pipeline_mode = #tpu.pipeline_mode<synchronous>, transform_indices = @transform_1, window_bounds = array<i64: 1, 128>}, {pipeline_mode = #tpu.pipeline_mode<synchronous>, transform_indices = @transform_2, window_bounds = array<i64: 1, 128>}, {transform_indices = @transform_3, window_bounds = array<i64: 128, 128>}]} {
    %c0 = arith.constant 0 : index
    %c0_0 = arith.constant 0 : index
    %0 = vector.load %arg1[%c0, %c0_0] : memref<128x128xbf16, #tpu.memory_space<vmem>>, vector<128x128xbf16>
    %1 = arith.extf %0 : vector<128x128xbf16> to vector<128x128xf32>
    %c0_1 = arith.constant 0 : index
    %c0_2 = arith.constant 0 : index
    %2 = vector.load %arg2[%c0_1, %c0_2] : memref<1x128xf32, #tpu.memory_space<vmem>>, vector<1x128xf32>
    %3 = vector.broadcast %2 : vector<1x128xf32> to vector<128x128xf32>
    %4 = arith.mulf %1, %3 : vector<128x128xf32>
    %c0_3 = arith.constant 0 : index
    %c0_4 = arith.constant 0 : index
    %5 = vector.load %arg3[%c0_3, %c0_4] : memref<1x128xf32, #tpu.memory_space<vmem>>, vector<1x128xf32>
    %6 = vector.broadcast %5 : vector<1x128xf32> to vector<128x128xf32>
    %7 = arith.addf %4, %6 : vector<128x128xf32>
    %c0_5 = arith.constant 0 : index
    %c0_6 = arith.constant 0 : index
    %8 = vector.load %arg4[%c0_5, %c0_6] : memref<128x128xf32, #tpu.memory_space<vmem>>, vector<128x128xf32>
    tpu.vector_store %arg4[%c0_5, %c0_6], %7 {strides = array<i32>} : memref<128x128xf32, #tpu.memory_space<vmem>>, vector<128x128xf32>,
    return
  }
  func.func @transform_0(%arg0: i32) -> (i32, i32) {
    %c0_i32 = arith.constant 0 : i32
    %c0_i32_0 = arith.constant 0 : i32
    return %arg0, %c0_i32 : i32, i32
  }
  func.func @transform_1(%arg0: i32) -> (i32, i32) {
    %c0_i32 = arith.constant 0 : i32
    %c0_i32_0 = arith.constant 0 : i32
    %c0_i32_1 = arith.constant 0 : i32
    return %c0_i32, %c0_i32_0 : i32, i32
  }
  func.func @transform_2(%arg0: i32) -> (i32, i32) {
    %c0_i32 = arith.constant 0 : i32
    %c0_i32_0 = arith.constant 0 : i32
    %c0_i32_1 = arith.constant 0 : i32
    return %c0_i32, %c0_i32_0 : i32, i32
  }
  func.func @transform_3(%arg0: i32) -> (i32, i32) {
    %c0_i32 = arith.constant 0 : i32
    %c0_i32_0 = arith.constant 0 : i32
    return %arg0, %c0_i32 : i32, i32
  }
}

</mosaic_0001>

<llo_original>
// kernel: spatial_pyramid_pooling_forward.3
$region0: #{spatial_pyramid_pooling_forward.3}
  #allocation0 [shape = 'u32[]', space=smem, size = 0x4, offset = 0x4, fixed_abs, tag = 'smem constant byte address 0x4 - core index']
  #allocation1 [shape = 'u32[144,128]{1,0:T(1,128)}', space=vmem, size = 0x12000, scoped, tag = 'internal scratch']
  %s0 = inlined_call_operand.vmem [shape: bf16[128,128], index: 0, kind: input, shape index: {}]
  %s1 = inlined_call_operand.vmem [shape: f32[1,128], index: 1, kind: input, shape index: {}]
  %s2 = inlined_call_operand.vmem [shape: f32[1,128], index: 2, kind: input, shape index: {}]
  %s3 = inlined_call_operand.vmem [shape: f32[128,128], index: 3, kind: output, shape index: {}]
  %s4 = sld [smem:[#allocation0]]
  $region22: #{spatial_pyramid_pooling_forward.3} parent=0
    _
  %s6 = ssub.s32 1, %s4
  %s7 = scalar_select 0, %s6, %s4
  // Predicated region
  $region2: #{spatial_pyramid_pooling_forward.3} parent=0 // pred_check
    _
  $region3: #{spatial_pyramid_pooling_forward.3} parent=0 // pred_check_branch
    %9 = sbr.rel (0) target = $region5
  $region4: #{spatial_pyramid_pooling_forward.3} parent=0 // pred_region
    _
  $region5: #{spatial_pyramid_pooling_forward.3} parent=0 // pred_fallthru
    _
  // Predicated region
  $region6: #{spatial_pyramid_pooling_forward.3} parent=0 // pred_check
    _
  $region7: #{spatial_pyramid_pooling_forward.3} parent=0 // pred_check_branch
    %11 = sbr.rel (0) target = $region9
  $region8: #{spatial_pyramid_pooling_forward.3} parent=0 // pred_region
    _
  $region9: #{spatial_pyramid_pooling_forward.3} parent=0 // pred_fallthru
    _
  // Predicated region
  $region10: #{spatial_pyramid_pooling_forward.3} parent=0 // pred_check
    _
  $region11: #{spatial_pyramid_pooling_forward.3} parent=0 // pred_check_branch
    %13 = sbr.rel (0) target = $region13
  $region12: #{spatial_pyramid_pooling_forward.3} parent=0 // pred_region
    _
  $region13: #{spatial_pyramid_pooling_forward.3} parent=0 // pred_fallthru
    _
  %v14 = vld [vmem:[%s0] sm:$0xf]
  %v15 = vld [vmem:[%s0 + $0x4] sm:$0xf]
  %v16 = vld [vmem:[%s0 + $0x8] sm:$0xf]
  %v17 = vld [vmem:[%s0 + $0xc] sm:$0xf]
  %v18 = vld [vmem:[%s0 + $0x10] sm:$0xf]
  %v19 = vld [vmem:[%s0 + $0x14] sm:$0xf]
  %v20 = vld [vmem:[%s0 + $0x18] sm:$0xf]
  %v21 = vld [vmem:[%s0 + $0x1c] sm:$0xf]
  %v22 = vld [vmem:[%s0 + $0x20] sm:$0xf]
  %v23 = vld [vmem:[%s0 + $0x24] sm:$0xf]
  %v24 = vld [vmem:[%s0 + $0x28] sm:$0xf]
  %v25 = vld [vmem:[%s0 + $0x2c] sm:$0xf]
  %v26 = vld [vmem:[%s0 + $0x30] sm:$0xf]
  %v27 = vld [vmem:[%s0 + $0x34] sm:$0xf]
  %v28 = vld [vmem:[%s0 + $0x38] sm:$0xf]
  %v29 = vld [vmem:[%s0 + $0x3c] sm:$0xf]
  %v30 = vunpack.c.l.bf16 %v14
  %v31 = vunpack.c.l.bf16 %v15
  %v32 = vunpack.c.l.bf16 %v16
  %v33 = vunpack.c.l.bf16 %v17
  %v34 = vunpack.c.l.bf16 %v18
  %v35 = vunpack.c.l.bf16 %v19
  %v36 = vunpack.c.l.bf16 %v20
  %v37 = vunpack.c.l.bf16 %v21
  %v38 = vunpack.c.l.bf16 %v22
  %v39 = vunpack.c.l.bf16 %v23
  %v40 = vunpack.c.l.bf16 %v24
  %v41 = vunpack.c.l.bf16 %v25
  %v42 = vunpack.c.l.bf16 %v26
  %v43 = vunpack.c.l.bf16 %v27
  %v44 = vunpack.c.l.bf16 %v28
  %v45 = vunpack.c.l.bf16 %v29
  %v46 = vld [vmem:[%s1] sm:$0x1]
  %v48 = vlaneseq
  %v49 = vshrl.u32 %v48, 7
  %v50 = vsub.s32 0, %v49
  %v51 = vrot.slane %v46, %v50
  %v53 = vmul.f32 %v30, %v51
  %v54 = vmul.f32 %v31, %v51
  %v55 = vmul.f32 %v32, %v51
  %v56 = vmul.f32 %v33, %v51
  %v57 = vmul.f32 %v34, %v51
  %v58 = vmul.f32 %v35, %v51
  %v59 = vmul.f32 %v36, %v51
  %v60 = vmul.f32 %v37, %v51
  %v61 = vmul.f32 %v38, %v51
  %v62 = vmul.f32 %v39, %v51
  %v63 = vmul.f32 %v40, %v51
  %v64 = vmul.f32 %v41, %v51
  %v65 = vmul.f32 %v42, %v51
  %v66 = vmul.f32 %v43, %v51
  %v67 = vmul.f32 %v44, %v51
  %v68 = vmul.f32 %v45, %v51
  %v69 = vld [vmem:[%s2] sm:$0x1]
  %v71 = vlaneseq
  %v72 = vshrl.u32 %v71, 7
  %v73 = vsub.s32 0, %v72
  %v74 = vrot.slane %v69, %v73
  %v76 = vadd.f32 %v53, %v74
  %v77 = vadd.f32 %v54, %v74
  %v78 = vadd.f32 %v55, %v74
  %v79 = vadd.f32 %v56, %v74
  %v80 = vadd.f32 %v57, %v74
  %v81 = vadd.f32 %v58, %v74
  %v82 = vadd.f32 %v59, %v74
  %v83 = vadd.f32 %v60, %v74
  %v84 = vadd.f32 %v61, %v74
  %v85 = vadd.f32 %v62, %v74
  %v86 = vadd.f32 %v63, %v74
  %v87 = vadd.f32 %v64, %v74
  %v88 = vadd.f32 %v65, %v74
  %v89 = vadd.f32 %v66, %v74
  %v90 = vadd.f32 %v67, %v74
  %v91 = vadd.f32 %v68, %v74
  %92 = vst [vmem:[%s3] sm:$0xff] %v76
  %93 = vst [vmem:[%s3 + $0x8] sm:$0xff] %v77
  %94 = vst [vmem:[%s3 + $0x10] sm:$0xff] %v78
  %95 = vst [vmem:[%s3 + $0x18] sm:$0xff] %v79
  %96 = vst [vmem:[%s3 + $0x20] sm:$0xff] %v80
  %97 = vst [vmem:[%s3 + $0x28] sm:$0xff] %v81
  %98 = vst [vmem:[%s3 + $0x30] sm:$0xff] %v82
  %99 = vst [vmem:[%s3 + $0x38] sm:$0xff] %v83
  %100 = vst [vmem:[%s3 + $0x40] sm:$0xff] %v84
  %101 = vst [vmem:[%s3 + $0x48] sm:$0xff] %v85
  %102 = vst [vmem:[%s3 + $0x50] sm:$0xff] %v86
  %103 = vst [vmem:[%s3 + $0x58] sm:$0xff] %v87
  %104 = vst [vmem:[%s3 + $0x60] sm:$0xff] %v88
  %105 = vst [vmem:[%s3 + $0x68] sm:$0xff] %v89
  %106 = vst [vmem:[%s3 + $0x70] sm:$0xff] %v90
  %107 = vst [vmem:[%s3 + $0x78] sm:$0xff] %v91
  // Predicated region
  $region14: #{spatial_pyramid_pooling_forward.3} parent=0 // pred_check
    _
  $region15: #{spatial_pyramid_pooling_forward.3} parent=0 // pred_check_branch
    %109 = sbr.rel (0) target = $region17
  $region16: #{spatial_pyramid_pooling_forward.3} parent=0 // pred_region
    _
  $region17: #{spatial_pyramid_pooling_forward.3} parent=0 // pred_fallthru
    _
  // Predicated region
  $region18: #{spatial_pyramid_pooling_forward.3} parent=0 // pred_check
    _
  $region19: #{spatial_pyramid_pooling_forward.3} parent=0 // pred_check_branch
    %111 = sbr.rel (0) target = $region21
  $region20: #{spatial_pyramid_pooling_forward.3} parent=0 // pred_region
    _
  $region21: #{spatial_pyramid_pooling_forward.3} parent=0 // pred_fallthru
    _

// kernel: spatial_pyramid_pooling_forward.2
$region0: #{spatial_pyramid_pooling_forward.2}
  #allocation0 [shape = 'u32[]', space=smem, size = 0x4, offset = 0x4, fixed_abs, tag = 'smem constant byte address 0x4 - core index']
  #allocation1 [shape = 'u32[144,128]{1,0:T(1,128)}', space=vmem, size = 0x12000, scoped, tag = 'internal scratch']
  %s0 = inlined_call_operand.vmem [shape: bf16[128,16], index: 0, kind: input, shape index: {}]
  %s1 = inlined_call_operand.vmem [shape: bf16[16,128], index: 1, kind: input, shape index: {}]
  %s2 = inlined_call_operand.vmem [shape: bf16[128,128], index: 2, kind: output, shape index: {0}]
  %s3 = inlined_call_operand.vmem [shape: f32[1,1,128], index: 3, kind: output, shape index: {1}]
  %s4 = inlined_call_operand.vmem [shape: f32[1,1,128], index: 4, kind: output, shape index: {2}]
  %5 = xla_tuple %s2, %s3, %s4
  %s6 = sld [smem:[#allocation0]]
  $region34: #{spatial_pyramid_pooling_forward.2} parent=0
    _
  %s8 = ssub.s32 1, %s6
  %s9 = scalar_select 0, %s8, %s6
  // Predicated region
  $region2: #{spatial_pyramid_pooling_forward.2} parent=0 // pred_check
    _
  $region3: #{spatial_pyramid_pooling_forward.2} parent=0 // pred_check_branch
    %11 = sbr.rel (0) target = $region5
  $region4: #{spatial_pyramid_pooling_forward.2} parent=0 // pred_region
    _
  $region5: #{spatial_pyramid_pooling_forward.2} parent=0 // pred_fallthru
    _
  // Predicated region
  $region6: #{spatial_pyramid_pooling_forward.2} parent=0 // pred_check
    _
  $region7: #{spatial_pyramid_pooling_forward.2} parent=0 // pred_check_branch
    %13 = sbr.rel (0) target = $region9
  $region8: #{spatial_pyramid_pooling_forward.2} parent=0 // pred_region
    _
  $region9: #{spatial_pyramid_pooling_forward.2} parent=0 // pred_fallthru
    _
  %v15 = vld [vmem:[%s0] sm:$0xf]
  %v16 = vld [vmem:[%s0 + $0x4] sm:$0xf]
  %v17 = vld [vmem:[%s0 + $0x8] sm:$0xf]
  %v18 = vld [vmem:[%s0 + $0xc] sm:$0xf]
  %v19 = vld [vmem:[%s0 + $0x10] sm:$0xf]
  %v20 = vld [vmem:[%s0 + $0x14] sm:$0xf]
  %v21 = vld [vmem:[%s0 + $0x18] sm:$0xf]
  %v22 = vld [vmem:[%s0 + $0x1c] sm:$0xf]
  %v23 = vld [vmem:[%s0 + $0x20] sm:$0xf]
  %v24 = vld [vmem:[%s0 + $0x24] sm:$0xf]
  %v25 = vld [vmem:[%s0 + $0x28] sm:$0xf]
  %v26 = vld [vmem:[%s0 + $0x2c] sm:$0xf]
  %v27 = vld [vmem:[%s0 + $0x30] sm:$0xf]
  %v28 = vld [vmem:[%s0 + $0x34] sm:$0xf]
  %v29 = vld [vmem:[%s0 + $0x38] sm:$0xf]
  %v30 = vld [vmem:[%s0 + $0x3c] sm:$0xf]
  %v31 = vld [vmem:[%s1] sm:$0xf]
  %v32 = vld [vmem:[%s1 + $0x4] sm:$0xf]
  %v49 = vunpack.c.l.b16 %v15
  %v50 = vunpack.c.l.b16 %v16
  %v51 = vunpack.c.l.b16 %v17
  %v52 = vunpack.c.l.b16 %v18
  %v53 = vunpack.c.l.b16 %v19
  %v54 = vunpack.c.l.b16 %v20
  %v55 = vunpack.c.l.b16 %v21
  %v56 = vunpack.c.l.b16 %v22
  %v57 = vunpack.c.l.b16 %v23
  %v58 = vunpack.c.l.b16 %v24
  %v59 = vunpack.c.l.b16 %v25
  %v60 = vunpack.c.l.b16 %v26
  %v61 = vunpack.c.l.b16 %v27
  %v62 = vunpack.c.l.b16 %v28
  %v63 = vunpack.c.l.b16 %v29
  %v64 = vunpack.c.l.b16 %v30
  %v65 = vpack.c.b16 %v50, %v49
  %v66 = vpack.c.b16 %v52, %v51
  %v67 = vpack.c.b16 %v54, %v53
  %v68 = vpack.c.b16 %v56, %v55
  %v69 = vpack.c.b16 %v58, %v57
  %v70 = vpack.c.b16 %v60, %v59
  %v71 = vpack.c.b16 %v62, %v61
  %v72 = vpack.c.b16 %v64, %v63
  %v75 = vunpack.c.l.b16 %v31
  %v76 = vunpack.c.l.b16 %v32
  %v77 = vpack.c.b16 %v76, %v75
  %vm79 = vcmask 130048
  %v81 = vsel %vm79, %v65, 0
  %v84 = vsel %vm79, %v66, 0
  %v87 = vsel %vm79, %v67, 0
  %v90 = vsel %vm79, %v68, 0
  %v93 = vsel %vm79, %v69, 0
  %v96 = vsel %vm79, %v70, 0
  %v99 = vsel %vm79, %v71, 0
  %v102 = vsel %vm79, %v72, 0
  %104 = vmatprep.subr.bf16.mxu0 0
  %105 = vmatpush1.bf16.msra.mxu0 0
  %106 = vmatprep.subr.bf16.mxu0 0
  %107 = vmatpush1.bf16.msra.mxu0 0
  %108 = vmatprep.subr.bf16.mxu0 0
  %109 = vmatpush1.bf16.msra.mxu0 0
  %110 = vmatprep.subr.bf16.mxu0 0
  %111 = vmatpush1.bf16.msra.mxu0 0
  %112 = vmatprep.subr.bf16.mxu0 0
  %113 = vmatpush1.bf16.msra.mxu0 0
  %114 = vmatprep.subr.bf16.mxu0 0
  %115 = vmatpush1.bf16.msra.mxu0 0
  %116 = vmatprep.subr.bf16.mxu0 0
  %117 = vmatpush1.bf16.msra.mxu0 0
  %118 = vmatprep.subr.bf16.mxu0 0
  %119 = vmatpush1.bf16.msra.mxu0 %v77
  %120 = vmatprep.subr.bf16.mxu0 0
  %121 = vmatpush2.bf16.msra.mxu0 0
  %122 = vmatprep.subr.bf16.mxu0 0
  %123 = vmatpush2.bf16.msra.mxu0 0
  %124 = vmatprep.subr.bf16.mxu0 0
  %125 = vmatpush2.bf16.msra.mxu0 0
  %126 = vmatprep.subr.bf16.mxu0 0
  %127 = vmatpush2.bf16.msra.mxu0 0
  %128 = vmatprep.subr.bf16.mxu0 0
  %129 = vmatpush2.bf16.msra.mxu0 0
  %130 = vmatprep.subr.bf16.mxu0 0
  %131 = vmatpush2.bf16.msra.mxu0 0
  %132 = vmatprep.subr.bf16.mxu0 0
  %133 = vmatpush2.bf16.msra.mxu0 0
  %134 = vmatprep.subr.bf16.mxu0 0
  %135 = vmatpush2.bf16.msra.mxu0 0
  %136 = vmatprep.mubr.bf16.mxu0 0
  %137 = vmatmul.mubr.bf16.gmra.mxu0 %v81
  %v138 = vpop.f32.mrf.mxu0
  %v139 = vadd.f32 0.0, %v138
  %v140 = vpop.f32.mrf.mxu0
  %v141 = vpop.f32.mrf.mxu0
  %v142 = vadd.f32 0.0, %v141
  %v143 = vpop.f32.mrf.mxu0
  %144 = vmatprep.mubr.bf16.mxu0 0
  %145 = vmatmul.mubr.bf16.gmra.mxu0 %v84
  %v146 = vpop.f32.mrf.mxu0
  %v147 = vadd.f32 0.0, %v146
  %v148 = vpop.f32.mrf.mxu0
  %v149 = vpop.f32.mrf.mxu0
  %v150 = vadd.f32 0.0, %v149
  %v151 = vpop.f32.mrf.mxu0
  %152 = vmatprep.mubr.bf16.mxu0 0
  %153 = vmatmul.mubr.bf16.gmra.mxu0 %v87
  %v154 = vpop.f32.mrf.mxu0
  %v155 = vadd.f32 0.0, %v154
  %v156 = vpop.f32.mrf.mxu0
  %v157 = vpop.f32.mrf.mxu0
  %v158 = vadd.f32 0.0, %v157
  %v159 = vpop.f32.mrf.mxu0
  %160 = vmatprep.mubr.bf16.mxu0 0
  %161 = vmatmul.mubr.bf16.gmra.mxu0 %v90
  %v162 = vpop.f32.mrf.mxu0
  %v163 = vadd.f32 0.0, %v162
  %v164 = vpop.f32.mrf.mxu0
  %v165 = vpop.f32.mrf.mxu0
  %v166 = vadd.f32 0.0, %v165
  %v167 = vpop.f32.mrf.mxu0
  %168 = vmatprep.mubr.bf16.mxu0 0
  %169 = vmatmul.mubr.bf16.gmra.mxu0 %v93
  %v170 = vpop.f32.mrf.mxu0
  %v171 = vadd.f32 0.0, %v170
  %v172 = vpop.f32.mrf.mxu0
  %v173 = vpop.f32.mrf.mxu0
  %v174 = vadd.f32 0.0, %v173
  %v175 = vpop.f32.mrf.mxu0
  %176 = vmatprep.mubr.bf16.mxu0 0
  %177 = vmatmul.mubr.bf16.gmra.mxu0 %v96
  %v178 = vpop.f32.mrf.mxu0
  %v179 = vadd.f32 0.0, %v178
  %v180 = vpop.f32.mrf.mxu0
  %v181 = vpop.f32.mrf.mxu0
  %v182 = vadd.f32 0.0, %v181
  %v183 = vpop.f32.mrf.mxu0
  %184 = vmatprep.mubr.bf16.mxu0 0
  %185 = vmatmul.mubr.bf16.gmra.mxu0 %v99
  %v186 = vpop.f32.mrf.mxu0
  %v187 = vadd.f32 0.0, %v186
  %v188 = vpop.f32.mrf.mxu0
  %v189 = vpop.f32.mrf.mxu0
  %v190 = vadd.f32 0.0, %v189
  %v191 = vpop.f32.mrf.mxu0
  %192 = vmatprep.mubr.bf16.mxu0 0
  %193 = vmatmul.mubr.bf16.gmra.mxu0 %v102
  %v194 = vpop.f32.mrf.mxu0
  %v195 = vadd.f32 0.0, %v194
  %v196 = vpop.f32.mrf.mxu0
  %v197 = vpop.f32.mrf.mxu0
  %v198 = vadd.f32 0.0, %v197
  %v199 = vpop.f32.mrf.mxu0
  %200 = vdwg.mxu0
  %v201 = vadd.f32 %v139, %v142
  %v202 = vadd.f32 %v201, %v147
  %v203 = vadd.f32 %v202, %v150
  %v204 = vadd.f32 %v203, %v155
  %v205 = vadd.f32 %v204, %v158
  %v206 = vadd.f32 %v205, %v163
  %v207 = vadd.f32 %v206, %v166
  %v208 = vadd.f32 %v207, %v171
  %v209 = vadd.f32 %v208, %v174
  %v210 = vadd.f32 %v209, %v179
  %v211 = vadd.f32 %v210, %v182
  %v212 = vadd.f32 %v211, %v187
  %v213 = vadd.f32 %v212, %v190
  %v214 = vadd.f32 %v213, %v195
  %v215 = vadd.f32 %v214, %v198
  %v216 = vrot.slane %v215, 4
  %v217 = vadd.f32 %v215, %v216
  %v218 = vrot.slane %v217, 2
  %v219 = vadd.f32 %v217, %v218
  %v220 = vrot.slane %v219, 1
  %v221 = vadd.f32 %v219, %v220
  %222 = vst [vmem:[%s3] sm:$0x1] %v221
  %v223 = vmul.f32 %v139, %v139
  %v224 = vmul.f32 %v142, %v142
  %v225 = vmul.f32 %v147, %v147
  %v226 = vmul.f32 %v150, %v150
  %v227 = vmul.f32 %v155, %v155
  %v228 = vmul.f32 %v158, %v158
  %v229 = vmul.f32 %v163, %v163
  %v230 = vmul.f32 %v166, %v166
  %v231 = vmul.f32 %v171, %v171
  %v232 = vmul.f32 %v174, %v174
  %v233 = vmul.f32 %v179, %v179
  %v234 = vmul.f32 %v182, %v182
  %v235 = vmul.f32 %v187, %v187
  %v236 = vmul.f32 %v190, %v190
  %v237 = vmul.f32 %v195, %v195
  %v238 = vmul.f32 %v198, %v198
  %v239 = vadd.f32 %v223, %v224
  %v240 = vadd.f32 %v239, %v225
  %v241 = vadd.f32 %v240, %v226
  %v242 = vadd.f32 %v241, %v227
  %v243 = vadd.f32 %v242, %v228
  %v244 = vadd.f32 %v243, %v229
  %v245 = vadd.f32 %v244, %v230
  %v246 = vadd.f32 %v245, %v231
  %v247 = vadd.f32 %v246, %v232
  %v248 = vadd.f32 %v247, %v233
  %v249 = vadd.f32 %v248, %v234
  %v250 = vadd.f32 %v249, %v235
  %v251 = vadd.f32 %v250, %v236
  %v252 = vadd.f32 %v251, %v237
  %v253 = vadd.f32 %v252, %v238
  %v254 = vrot.slane %v253, 4
  %v255 = vadd.f32 %v253, %v254
  %v256 = vrot.slane %v255, 2
  %v257 = vadd.f32 %v255, %v256
  %v258 = vrot.slane %v257, 1
  %v259 = vadd.f32 %v257, %v258
  %260 = vst [vmem:[%s4] sm:$0x1] %v259
  %v261 = vpack.c.bf16 %v142, %v139
  %v262 = vpack.c.bf16 %v150, %v147
  %v263 = vpack.c.bf16 %v158, %v155
  %v264 = vpack.c.bf16 %v166, %v163
  %v265 = vpack.c.bf16 %v174, %v171
  %v266 = vpack.c.bf16 %v182, %v179
  %v267 = vpack.c.bf16 %v190, %v187
  %v268 = vpack.c.bf16 %v198, %v195
  %v277 = vunpack.c.l.b16 %v261
  %v278 = vunpack.c.h.b16 %v261
  %v279 = vunpack.c.l.b16 %v262
  %v280 = vunpack.c.h.b16 %v262
  %v281 = vunpack.c.l.b16 %v263
  %v282 = vunpack.c.h.b16 %v263
  %v283 = vunpack.c.l.b16 %v264
  %v284 = vunpack.c.h.b16 %v264
  %v285 = vunpack.c.l.b16 %v265
  %v286 = vunpack.c.h.b16 %v265
  %v287 = vunpack.c.l.b16 %v266
  %v288 = vunpack.c.h.b16 %v266
  %v289 = vunpack.c.l.b16 %v267
  %v290 = vunpack.c.h.b16 %v267
  %v291 = vunpack.c.l.b16 %v268
  %v292 = vunpack.c.h.b16 %v268
  %v293 = vpack.c.b16 %v277, %v277
  %v294 = vpack.c.b16 %v278, %v278
  %v295 = vpack.c.b16 %v279, %v279
  %v296 = vpack.c.b16 %v280, %v280
  %v297 = vpack.c.b16 %v281, %v281
  %v298 = vpack.c.b16 %v282, %v282
  %v299 = vpack.c.b16 %v283, %v283
  %v300 = vpack.c.b16 %v284, %v284
  %v301 = vpack.c.b16 %v285, %v285
  %v302 = vpack.c.b16 %v286, %v286
  %v303 = vpack.c.b16 %v287, %v287
  %v304 = vpack.c.b16 %v288, %v288
  %v305 = vpack.c.b16 %v289, %v289
  %v306 = vpack.c.b16 %v290, %v290
  %v307 = vpack.c.b16 %v291, %v291
  %v308 = vpack.c.b16 %v292, %v292
  %325 = vst [vmem:[%s2] sm:$0xf] %v293
  %326 = vst [vmem:[%s2 + $0x4] sm:$0xf] %v294
  %327 = vst [vmem:[%s2 + $0x8] sm:$0xf] %v295
  %328 = vst [vmem:[%s2 + $0xc] sm:$0xf] %v296
  %329 = vst [vmem:[%s2 + $0x10] sm:$0xf] %v297
  %330 = vst [vmem:[%s2 + $0x14] sm:$0xf] %v298
  %331 = vst [vmem:[%s2 + $0x18] sm:$0xf] %v299
  %332 = vst [vmem:[%s2 + $0x1c] sm:$0xf] %v300
  %333 = vst [vmem:[%s2 + $0x20] sm:$0xf] %v301
  %334 = vst [vmem:[%s2 + $0x24] sm:$0xf] %v302
  %335 = vst [vmem:[%s2 + $0x28] sm:$0xf] %v303
  %336 = vst [vmem:[%s2 + $0x2c] sm:$0xf] %v304
  %337 = vst [vmem:[%s2 + $0x30] sm:$0xf] %v305
  %338 = vst [vmem:[%s2 + $0x34] sm:$0xf] %v306
  %339 = vst [vmem:[%s2 + $0x38] sm:$0xf] %v307
  %340 = vst [vmem:[%s2 + $0x3c] sm:$0xf] %v308
  // Predicated region
  $region10: #{spatial_pyramid_pooling_forward.2} parent=0 // pred_check
    _
  $region11: #{spatial_pyramid_pooling_forward.2} parent=0 // pred_check_branch
    %342 = sbr.rel (0) target = $region13
  $region12: #{spatial_pyramid_pooling_forward.2} parent=0 // pred_region
    _
  $region13: #{spatial_pyramid_pooling_forward.2} parent=0 // pred_fallthru
    _
  // Predicated region
  $region14: #{spatial_pyramid_pooling_forward.2} parent=0 // pred_check
    _
  $region15: #{spatial_pyramid_pooling_forward.2} parent=0 // pred_check_branch
    %344 = sbr.rel (0) target = $region17
  $region16: #{spatial_pyramid_pooling_forward.2} parent=0 // pred_region
    _
  $region17: #{spatial_pyramid_pooling_forward.2} parent=0 // pred_fallthru
    _
  // Predicated region
  $region18: #{spatial_pyramid_pooling_forward.2} parent=0 // pred_check
    _
  $region19: #{spatial_pyramid_pooling_forward.2} parent=0 // pred_check_branch
    %346 = sbr.rel (0) target = $region21
  $region20: #{spatial_pyramid_pooling_forward.2} parent=0 // pred_region
    _
  $region21: #{spatial_pyramid_pooling_forward.2} parent=0 // pred_fallthru
    _
  // Predicated region
  $region22: #{spatial_pyramid_pooling_forward.2} parent=0 // pred_check
    _
  $region23: #{spatial_pyramid_pooling_forward.2} parent=0 // pred_check_branch
    %348 = sbr.rel (0) target = $region25
  $region24: #{spatial_pyramid_pooling_forward.2} parent=0 // pred_region
    _
  $region25: #{spatial_pyramid_pooling_forward.2} parent=0 // pred_fallthru
    _
  // Predicated region
  $region26: #{spatial_pyramid_pooling_forward.2} parent=0 // pred_check
    _
  $region27: #{spatial_pyramid_pooling_forward.2} parent=0 // pred_check_branch
    %350 = sbr.rel (0) target = $region29
  $region28: #{spatial_pyramid_pooling_forward.2} parent=0 // pred_region
    _
  $region29: #{spatial_pyramid_pooling_forward.2} parent=0 // pred_fallthru
    _
  // Predicated region
  $region30: #{spatial_pyramid_pooling_forward.2} parent=0 // pred_check
    _
  $region31: #{spatial_pyramid_pooling_forward.2} parent=0 // pred_check_branch
    %352 = sbr.rel (0) target = $region33
  $region32: #{spatial_pyramid_pooling_forward.2} parent=0 // pred_region
    _
  $region33: #{spatial_pyramid_pooling_forward.2} parent=0 // pred_fallthru
    _

</llo_original>
